<compile_context>
chip_gen: v5e
topology: v5e:2x2
jax: 0.10.0
libtpu: 0.0.40
codegen_flags: <defaults>
</compile_context>

<pallas_src>
import functools
import math

import jax
import jax.numpy as jnp
from jax.experimental import pallas as pl
from jax.experimental.pallas import tpu as pltpu


def _focal_loss_kernel(x_ref, t_ref, acc_ref, *, gamma, binary, rows_total,
                       tile_rows, steps):
    i = pl.program_id(0)
    j = pl.program_id(1)

    @pl.when(j == 0)
    def _():
        acc_ref[...] = jnp.zeros_like(acc_ref)

    x = x_ref[...].astype(jnp.float32)
    t = t_ref[...].astype(jnp.float32)

    # TODO(synk): pos_weight branch not wired (module default is None).
    z = jnp.exp(-jnp.abs(x))                 # EUP, reused everywhere below
    u = 1.0 + z                              # shared: log + reciprocal
    r = pl.reciprocal(u, approx=True)        # EUP vrcp (single issue)
    r = r * (2.0 - u * r)                    # one Newton step (VPU) -> ~f32 exact
    lse = jnp.log(u)                         # == log1p(z) to ~1e-7 abs

    if binary:
        # Hard {0,1} labels: pt = sigmoid(x*(2t-1)) -> no exp(-a) needed.
        w = x * (1.0 - 2.0 * t)              # w = -x*(2t-1); |w| == |x|
        bce = jnp.maximum(w, 0.0) + lse
        om = jnp.where(w >= 0.0, 1.0, z) * r   # om = 1 - pt
    else:
        # General / soft-label path.
        a = jnp.maximum(x, 0.0) - x * t
        bce = a + lse
        om = 1.0 - jnp.exp(-a) * r             # pt = exp(-a)/(1+z)

    if isinstance(gamma, int) and gamma >= 0:
        wgt = jnp.ones_like(om)
        for _ in range(gamma):               # gamma==2 -> om*om, never pow
            wgt = wgt * om
    else:
        wgt = om ** gamma                    # fractional gamma fallback
    focal = wgt * bce                        # alpha & 1/n applied on the scalar

    # Mask the ragged tail / clamped (nominally out-of-range) blocks.
    tr, c = focal.shape
    start = (i * steps + j) * tile_rows      # nominal (pre-clamp) row start
    ridx = start + jax.lax.broadcasted_iota(jnp.int32, (tr, c), 0)
    focal = jnp.where(ridx < rows_total, focal, 0.0)

    # Fold (tile_rows, lanes) onto the (8, lanes) accumulator with vreg adds.
    if tr % 8 == 0:
        acc_ref[...] += focal.reshape(tr // 8, 8, c).sum(axis=0)
    else:
        # Tiny-input path (fewer than 8 rows): one cross-sublane reduce.
        acc_ref[0:1, :] += jnp.sum(focal, axis=0, keepdims=True)


def _lane_dense_view(x, t):
    """Flatten to a lane-dense 2-D view without copying (reshape only)."""
    total = math.prod(x.shape)
    for lanes in (512, 256, 128):
        if total % lanes == 0:
            return x.reshape(-1, lanes), t.reshape(-1, lanes), lanes
    # Fallback: keep the natural last dim (lane-sparse but still copy-free).
    lanes = x.shape[-1] if x.ndim >= 2 else total
    return x.reshape(-1, lanes), t.reshape(-1, lanes), lanes


def focal_loss(logits, targets, *, gamma=2, alpha=None, reduction='mean',
               pos_weight=None, binary_targets=None,
               target_block_bytes=1 * 1024 * 1024,
               vmem_limit_bytes=32 * 1024 * 1024):
    """FocalLoss forward (reduction='mean'/'sum') via a Pallas TPU kernel."""
    assert logits.shape == targets.shape
    if pos_weight is not None:
        # TODO(synk): pos_weight-weighted BCE not implemented (default None).
        raise NotImplementedError("pos_weight not supported")

    n_valid = math.prod(logits.shape)

    if binary_targets is None:
        binary_targets = bool(targets.dtype == jnp.bool_
                              or jnp.issubdtype(targets.dtype, jnp.integer))
    if targets.dtype == jnp.bool_:
        # Avoid i1 VMEM DMAs; bf16 represents 0/1 exactly and stays narrow.
        targets = targets.astype(jnp.bfloat16)

    if isinstance(gamma, float) and float(gamma).is_integer():
        gamma = int(gamma)

    x2, t2, lanes = _lane_dense_view(logits, targets)
    rows = x2.shape[0]

    # Row tile: multiple of the narrowest input dtype's sublane packing,
    # sized so the f32 working block is ~target_block_bytes (EUP-bound kernel;
    # DMA is hidden already at this size and VMEM stays small on v7x).
    align = {4: 8, 2: 16, 1: 32}.get(
        min(x2.dtype.itemsize, t2.dtype.itemsize), 8)
    if rows <= align:
        tile_rows = rows                      # single full-extent block
    else:
        tile_rows = (target_block_bytes // (lanes * 4)) // align * align
        tile_rows = max(align, min(tile_rows, (rows // align) * align))

    total_blocks = -(-rows // tile_rows)
    num_parts = 2 if total_blocks >= 4 else 1   # small-input path: 1 part
    steps = -(-total_blocks // num_parts)

    # Clamp nominally out-of-range block indices (odd block counts); their
    # contribution is zeroed by the in-kernel row mask.
    in_map = lambda i, j: (jnp.minimum(i * steps + j, total_blocks - 1), 0)

    kernel = functools.partial(
        _focal_loss_kernel, gamma=gamma, binary=bool(binary_targets),
        rows_total=rows, tile_rows=tile_rows, steps=steps)

    cost = pl.CostEstimate(
        flops=14 * rows * lanes,
        transcendentals=3 * rows * lanes,
        bytes_accessed=rows * lanes * (x2.dtype.itemsize + t2.dtype.itemsize)
        + num_parts * 8 * lanes * 4)

    partial_sums = pl.pallas_call(
        kernel,
        out_shape=jax.ShapeDtypeStruct((num_parts * 8, lanes), jnp.float32),
        grid_spec=pltpu.PrefetchScalarGridSpec(
            num_scalar_prefetch=0,
            grid=(num_parts, steps),
            in_specs=[
                pl.BlockSpec((tile_rows, lanes), in_map),
                pl.BlockSpec((tile_rows, lanes), in_map),
            ],
            out_specs=pl.BlockSpec((8, lanes), lambda i, j: (i, 0)),
        ),
        compiler_params=pltpu.CompilerParams(
            dimension_semantics=("parallel", "arbitrary"),
            vmem_limit_bytes=vmem_limit_bytes),
        cost_estimate=cost,
    )(x2, t2)

    total = jnp.sum(partial_sums, dtype=jnp.float32)
    if alpha is not None:
        total = jnp.float32(alpha) * total          # hoisted scalar scaling
    if reduction == 'mean':
        return total / jnp.float32(n_valid)
    elif reduction == 'sum':
        return total
    else:
        # TODO(synk): reduction='none' (per-element output) not implemented.
        raise NotImplementedError("reduction='none' not supported")


def focal_loss_ref(logits, targets, gamma=2, alpha=None):
    x = logits.astype(jnp.float32)
    t = targets.astype(jnp.float32)
    bce = jnp.maximum(x, 0.0) - x * t + jnp.log1p(jnp.exp(-jnp.abs(x)))
    pt = jnp.exp(-bce)
    focal = (1.0 - pt) ** gamma * bce
    if alpha is not None:
        focal = alpha * focal
    return jnp.mean(focal)


if __name__ == "__main__":
    key = jax.random.PRNGKey(0)
    k1, k2, k3, k4 = jax.random.split(key, 4)

    checks = []

    # (a) multi-label head, hard {0,1} targets -> binary fast path
    N, C = 32, 128
    logits_a = jax.random.normal(k1, (N, C), dtype=jnp.float32) * 2.0
    targets_a = (jax.random.uniform(k2, (N, C)) > 0.5).astype(jnp.float32)
    checks.append((logits_a, targets_a, {"binary_targets": True}))

    # (b) same shape, soft labels in [0,1] -> general path
    targets_b = jax.random.uniform(k3, (N, C), dtype=jnp.float32)
    checks.append((logits_a, targets_b, {}))

    # (c) 4-D input, few rows after lane-dense flatten -> tiny-tile fold path
    x_c = jax.random.normal(k4, (2, 4, 16, 16), dtype=jnp.float32)
    t_c = (jax.random.uniform(k2, (2, 4, 16, 16)) > 0.5).astype(jnp.bfloat16)
    checks.append((x_c, t_c, {"binary_targets": True}))

    # (d) ragged rows / odd channel count -> in-kernel tail masking path
    x_d = jax.random.normal(k1, (203, 40), dtype=jnp.float32)
    t_d = jax.random.uniform(k3, (203, 40), dtype=jnp.float32)
    checks.append((x_d, t_d, {}))

    for lg, tg, kw in checks:
        out = jax.block_until_ready(
            focal_loss(lg, tg, gamma=2, alpha=None, **kw))
        ref = focal_loss_ref(lg, tg, gamma=2, alpha=None)
        assert jnp.allclose(out, ref, rtol=2e-5, atol=1e-6), (kw, out, ref)

    print("KERNEL_OK")
</pallas_src>

<mosaic_0001>
module attributes {stable_mosaic.version = 11 : i64} {
  func.func @_focal_loss_kernel(%arg0: i32, %arg1: i32, %arg2: memref<8x512xf32, #tpu.memory_space<vmem>>, %arg3: memref<8x512xf32, #tpu.memory_space<vmem>>, %arg4: memref<8x512xf32, #tpu.memory_space<vmem>>) attributes {dimension_semantics = [#tpu.dimension_semantics<parallel>, #tpu.dimension_semantics<arbitrary>], iteration_bounds = array<i64: 1, 1>, scalar_prefetch = 0 : i64, scratch_operands = 0 : i64, tpu.core_type = #tpu.core_type<tc>, window_params = [{transform_indices = @transform_0, window_bounds = array<i64: 8, 512>}, {transform_indices = @transform_1, window_bounds = array<i64: 8, 512>}, {transform_indices = @transform_2, window_bounds = array<i64: 8, 512>}]} {
    %c0_i32 = arith.constant 0 : i32
    %0 = arith.cmpi eq, %arg1, %c0_i32 : i32
    %1 = arith.extui %0 : i1 to i32
    %c0_i32_0 = arith.constant 0 : i32
    %2 = arith.cmpi ne, %1, %c0_i32_0 : i32
    scf.if %2 {
      %cst_19 = arith.constant 0.000000e+00 : f32
      %49 = vector.broadcast %cst_19 : f32 to vector<8x512xf32>
      %c0_20 = arith.constant 0 : index
      %c0_21 = arith.constant 0 : index
      %50 = vector.load %arg4[%c0_20, %c0_21] : memref<8x512xf32, #tpu.memory_space<vmem>>, vector<8x512xf32>
      tpu.vector_store %arg4[%c0_20, %c0_21], %49 {strides = array<i32>} : memref<8x512xf32, #tpu.memory_space<vmem>>, vector<8x512xf32>,
    } else {
    }
    %c0 = arith.constant 0 : index
    %c0_1 = arith.constant 0 : index
    %3 = vector.load %arg2[%c0, %c0_1] : memref<8x512xf32, #tpu.memory_space<vmem>>, vector<8x512xf32>
    %c0_2 = arith.constant 0 : index
    %c0_3 = arith.constant 0 : index
    %4 = vector.load %arg3[%c0_2, %c0_3] : memref<8x512xf32, #tpu.memory_space<vmem>>, vector<8x512xf32>
    %5 = math.absf %3 : vector<8x512xf32>
    %cst = arith.constant 0.000000e+00 : f32
    %6 = vector.broadcast %cst : f32 to vector<8x512xf32>
    %7 = arith.subf %6, %5 : vector<8x512xf32>
    %8 = math.exp %7 : vector<8x512xf32>
    %cst_4 = arith.constant 1.000000e+00 : f32
    %9 = vector.broadcast %cst_4 : f32 to vector<8x512xf32>
    %10 = arith.addf %9, %8 : vector<8x512xf32>
    %11 = tpu.reciprocal %10 {approx = true} : vector<8x512xf32> -> vector<8x512xf32>
    %12 = arith.mulf %10, %11 : vector<8x512xf32>
    %cst_5 = arith.constant 2.000000e+00 : f32
    %13 = vector.broadcast %cst_5 : f32 to vector<8x512xf32>
    %14 = arith.subf %13, %12 : vector<8x512xf32>
    %15 = arith.mulf %11, %14 : vector<8x512xf32>
    %16 = math.log %10 : vector<8x512xf32>
    %cst_6 = arith.constant 2.000000e+00 : f32
    %17 = vector.broadcast %cst_6 : f32 to vector<8x512xf32>
    %18 = arith.mulf %17, %4 : vector<8x512xf32>
    %cst_7 = arith.constant 1.000000e+00 : f32
    %19 = vector.broadcast %cst_7 : f32 to vector<8x512xf32>
    %20 = arith.subf %19, %18 : vector<8x512xf32>
    %21 = arith.mulf %3, %20 : vector<8x512xf32>
    %cst_8 = arith.constant 0.000000e+00 : f32
    %22 = vector.broadcast %cst_8 : f32 to vector<8x512xf32>
    %23 = arith.maximumf %21, %22 : vector<8x512xf32>
    %24 = arith.addf %23, %16 : vector<8x512xf32>
    %cst_9 = arith.constant 0.000000e+00 : f32
    %25 = vector.broadcast %cst_9 : f32 to vector<8x512xf32>
    %26 = arith.cmpf oge, %21, %25 : vector<8x512xf32>
    %cst_10 = arith.constant 1.000000e+00 : f32
    %27 = vector.broadcast %cst_10 : f32 to vector<8x512xf32>
    %28 = arith.select %26, %27, %8 : vector<8x512xi1>, vector<8x512xf32>
    %29 = arith.mulf %28, %15 : vector<8x512xf32>
    %cst_11 = arith.constant 1.000000e+00 : f32
    %30 = vector.broadcast %cst_11 : f32 to vector<8x512xf32>
    %31 = arith.mulf %30, %29 : vector<8x512xf32>
    %32 = arith.mulf %31, %29 : vector<8x512xf32>
    %33 = arith.mulf %32, %24 : vector<8x512xf32>
    %c1_i32 = arith.constant 1 : i32
    %34 = arith.muli %arg0, %c1_i32 : i32
    %35 = arith.addi %34, %arg1 : i32
    %c8_i32 = arith.constant 8 : i32
    %36 = arith.muli %35, %c8_i32 : i32
    %37 = tpu.iota {dimensions = array<i32: 0>} : vector<8x512xi32>
    %38 = vector.broadcast %36 : i32 to vector<8x512xi32>
    %39 = arith.addi %38, %37 : vector<8x512xi32>
    %c8_i32_12 = arith.constant 8 : i32
    %40 = vector.broadcast %c8_i32_12 : i32 to vector<8x512xi32>
    %41 = arith.cmpi slt, %39, %40 : vector<8x512xi32>
    %cst_13 = arith.constant 0.000000e+00 : f32
    %42 = vector.broadcast %cst_13 : f32 to vector<8x512xf32>
    %43 = arith.select %41, %33, %42 : vector<8x512xi1>, vector<8x512xf32>
    %c0_14 = arith.constant 0 : index
    %c0_15 = arith.constant 0 : index
    %44 = vector.load %arg4[%c0_14, %c0_15] : memref<8x512xf32, #tpu.memory_space<vmem>>, vector<8x512xf32>
    %45 = vector.shape_cast %43 : vector<8x512xf32> to vector<1x8x512xf32>
    %cst_16 = arith.constant dense<0.000000e+00> : vector<8x512xf32>
    %46 = vector.multi_reduction <add>, %45, %cst_16 [0] : vector<1x8x512xf32> to vector<8x512xf32>
    %47 = arith.addf %44, %46 : vector<8x512xf32>
    %c0_17 = arith.constant 0 : index
    %c0_18 = arith.constant 0 : index
    %48 = vector.load %arg4[%c0_17, %c0_18] : memref<8x512xf32, #tpu.memory_space<vmem>>, vector<8x512xf32>
    tpu.vector_store %arg4[%c0_17, %c0_18], %47 {strides = array<i32>} : memref<8x512xf32, #tpu.memory_space<vmem>>, vector<8x512xf32>,
    return
  }
  func.func @transform_0(%arg0: i32, %arg1: i32) -> (i32, i32) {
    %c1_i32 = arith.constant 1 : i32
    %0 = arith.muli %arg0, %c1_i32 : i32
    %1 = arith.addi %0, %arg1 : i32
    %c0_i32 = arith.constant 0 : i32
    %2 = arith.minsi %1, %c0_i32 : i32
    %c0_i32_0 = arith.constant 0 : i32
    %c0_i32_1 = arith.constant 0 : i32
    return %2, %c0_i32_0 : i32, i32
  }
  func.func @transform_1(%arg0: i32, %arg1: i32) -> (i32, i32) {
    %c1_i32 = arith.constant 1 : i32
    %0 = arith.muli %arg0, %c1_i32 : i32
    %1 = arith.addi %0, %arg1 : i32
    %c0_i32 = arith.constant 0 : i32
    %2 = arith.minsi %1, %c0_i32 : i32
    %c0_i32_0 = arith.constant 0 : i32
    %c0_i32_1 = arith.constant 0 : i32
    return %2, %c0_i32_0 : i32, i32
  }
  func.func @transform_2(%arg0: i32, %arg1: i32) -> (i32, i32) {
    %c0_i32 = arith.constant 0 : i32
    %c0_i32_0 = arith.constant 0 : i32
    return %arg0, %c0_i32 : i32, i32
  }
}

</mosaic_0001>

<llo_original>
// kernel: tpu_custom_call.1
$region0: #{tpu_custom_call.1}
  #allocation0 [shape = 'u32[]', space=smem, size = 0x4, offset = 0x4, fixed_abs, tag = 'smem constant byte address 0x4 - core index']
  #allocation1 [shape = 'u32[72,128]{1,0:T(1,128)}', space=vmem, size = 0x9000, scoped, tag = 'internal scratch']
  %s0 = inlined_call_operand.hbm [shape: f32[8,512], index: 0, kind: input, shape index: {}]
  %s1 = inlined_call_operand.hbm [shape: f32[8,512], index: 1, kind: input, shape index: {}]
  %s2 = inlined_call_operand.hbm [shape: f32[8,512], index: 2, kind: output, shape index: {}]
  %s3 = sld [smem:[#allocation0]]
  $region30: #{tpu_custom_call.1} parent=0
    _
  %s5 = ssub.s32 1, %s3
  %s6 = scalar_select 0, %s5, %s3
  $region1: #{tpu_custom_call.1} parent=0
    #allocation2 [shape = 'u8[16384]{0}', space=vmem, size = 0x4000, scoped, tag = 'input window, operand 0, single buffered']
    #allocation3 [shape = 's32[1]{0}', space=sflag, size = 0x4, scoped, tag = 'scoped memory for tpu_custom_call.1']
    #allocation4 [shape = 's32[1]{0}', space=sflag, size = 0x4, scoped, tag = 'scoped memory for tpu_custom_call.1']
    #allocation5 [shape = 'u8[16384]{0}', space=vmem, size = 0x4000, scoped, tag = 'input window, operand 1, single buffered']
    #allocation6 [shape = 's32[1]{0}', space=sflag, size = 0x4, scoped, tag = 'scoped memory for tpu_custom_call.1']
    #allocation7 [shape = 'u8[16384]{0}', space=vmem, size = 0x4000, scoped, tag = 'output window, operand 0, single buffered']
    %7 = vsyncpa [#allocation3], 0
    %8 = vsyncpa [#allocation6], 0
    %9 = vsyncpa [#allocation4], 0
    // Predicated region
    $region2: #{tpu_custom_call.1} parent=1 // pred_check
      _
    $region3: #{tpu_custom_call.1} parent=1 // pred_check_branch
      %11 = sbr.rel (0) target = $region5
    $region4: #{tpu_custom_call.1} parent=1 // pred_region
      %s12 = sadd.s32 0, 0
      %p13 = scmp.lt.s32.totalorder %s12, 0
      %s14 = scalar_select %p13, %s12, 0
      %16 = vsyncadd [#allocation3], 0
      %s17 = smul.addr %s14, 4
      %s18 = smul.addr %s17, 8
      %s19 = scalar_lea.hbm %s0, %s18
      %s21 = sshll.u32 %s19, 4
      %s22 = int_to_ptr.hbm [resolvable:$true] %s21
      %s23 = sshll.u32 [#allocation2], 4
      %s24 = int_to_ptr.vmem [resolvable:$true] %s23
      %26 = dma.hbm_to_vmem [thread:$0]  %s22, 512, %s24, [#allocation3]
    $region5: #{tpu_custom_call.1} parent=1 // pred_fallthru
      _
    // Predicated region
    $region6: #{tpu_custom_call.1} parent=1 // pred_check
      _
    $region7: #{tpu_custom_call.1} parent=1 // pred_check_branch
      %28 = sbr.rel (0) target = $region9
    $region8: #{tpu_custom_call.1} parent=1 // pred_region
      %s29 = sadd.s32 0, 0
      %p30 = scmp.lt.s32.totalorder %s29, 0
      %s31 = scalar_select %p30, %s29, 0
      %33 = vsyncadd [#allocation6], 0
      %s34 = smul.addr %s31, 4
      %s35 = smul.addr %s34, 8
      %s36 = scalar_lea.hbm %s1, %s35
      %s38 = sshll.u32 %s36, 4
      %s39 = int_to_ptr.hbm [resolvable:$true] %s38
      %s40 = sshll.u32 [#allocation5], 4
      %s41 = int_to_ptr.vmem [resolvable:$true] %s40
      %43 = dma.hbm_to_vmem [thread:$0]  %s39, 512, %s41, [#allocation6]
    $region9: #{tpu_custom_call.1} parent=1 // pred_fallthru
      _
    // Predicated region
    $region10: #{tpu_custom_call.1} parent=1 // pred_check
      _
    $region11: #{tpu_custom_call.1} parent=1 // pred_check_branch
      %45 = sbr.rel (0) target = $region13
    $region12: #{tpu_custom_call.1} parent=1 // pred_region
      %47 = dma.done [#allocation3], 512
    $region13: #{tpu_custom_call.1} parent=1 // pred_fallthru
      _
    // Predicated region
    $region14: #{tpu_custom_call.1} parent=1 // pred_check
      _
    $region15: #{tpu_custom_call.1} parent=1 // pred_check_branch
      %49 = sbr.rel (0) target = $region17
    $region16: #{tpu_custom_call.1} parent=1 // pred_region
      %51 = dma.done [#allocation6], 512
    $region17: #{tpu_custom_call.1} parent=1 // pred_fallthru
      _
    %s52 = sadd.s32 0, 0
    %p53 = scmp.lt.s32.totalorder %s52, 0
    %s54 = scalar_select %p53, %s52, 0
    %s55 = sadd.s32 0, 0
    %p56 = scmp.lt.s32.totalorder %s55, 0
    %s57 = scalar_select %p56, %s55, 0
    %p58 = scmp.eq.s32.totalorder 0, 0
    // Predicated region
    $region18: #{tpu_custom_call.1} parent=1 // pred_check
      %p59 = pneg %p58
    $region19: #{tpu_custom_call.1} parent=1 // pred_check_branch
      %61 = sbr.rel (%p59) target = $region21
    $region20: #{tpu_custom_call.1} parent=1 // pred_region
      %62 = vst [vmem:[#allocation7] sm:$0xff] 0.0
      %63 = vst [vmem:[#allocation7 + $0x8] sm:$0xff] 0.0
      %64 = vst [vmem:[#allocation7 + $0x10] sm:$0xff] 0.0
      %65 = vst [vmem:[#allocation7 + $0x18] sm:$0xff] 0.0
    $region21: #{tpu_custom_call.1} parent=1 // pred_fallthru
      _
    %v66 = vld [vmem:[#allocation2] sm:$0xff]
    %v67 = vld [vmem:[#allocation2 + $0x8] sm:$0xff]
    %v68 = vld [vmem:[#allocation2 + $0x10] sm:$0xff]
    %v69 = vld [vmem:[#allocation2 + $0x18] sm:$0xff]
    %v70 = vld [vmem:[#allocation5] sm:$0xff]
    %v71 = vld [vmem:[#allocation5 + $0x8] sm:$0xff]
    %v72 = vld [vmem:[#allocation5 + $0x10] sm:$0xff]
    %v73 = vld [vmem:[#allocation5 + $0x18] sm:$0xff]
    %v74 = vand.u32 2147483647, %v66
    %v75 = vand.u32 2147483647, %v67
    %v76 = vand.u32 2147483647, %v68
    %v77 = vand.u32 2147483647, %v69
    %v78 = vsub.f32 0.0, %v74
    %v79 = vsub.f32 0.0, %v75
    %v80 = vsub.f32 0.0, %v76
    %v81 = vsub.f32 0.0, %v77
    %v82 = vmul.f32 %v78, 1.442695
    %v83 = vpow.pop %v82
    %v84 = vmul.f32 %v79, 1.442695
    %v85 = vpow.pop %v84
    %v86 = vmul.f32 %v80, 1.442695
    %v87 = vpow.pop %v86
    %v88 = vmul.f32 %v81, 1.442695
    %v89 = vpow.pop %v88
    %v90 = vadd.f32 %v83, 1.0
    %v91 = vadd.f32 %v85, 1.0
    %v92 = vadd.f32 %v87, 1.0
    %v93 = vadd.f32 %v89, 1.0
    %v94 = vrcp.pop %v90
    %v95 = vrcp.pop %v91
    %v96 = vrcp.pop %v92
    %v97 = vrcp.pop %v93
    %v98 = vmul.f32 %v90, %v94
    %v99 = vmul.f32 %v91, %v95
    %v100 = vmul.f32 %v92, %v96
    %v101 = vmul.f32 %v93, %v97
    %v102 = vsub.f32 2.0, %v98
    %v103 = vsub.f32 2.0, %v99
    %v104 = vsub.f32 2.0, %v100
    %v105 = vsub.f32 2.0, %v101
    %v106 = vmul.f32 %v94, %v102
    %v107 = vmul.f32 %v95, %v103
    %v108 = vmul.f32 %v96, %v104
    %v109 = vmul.f32 %v97, %v105
    %v110 = vlog2.pop %v90
    %v111 = vmul.f32 %v110, 0.6931472
    %v112 = vlog2.pop %v91
    %v113 = vmul.f32 %v112, 0.6931472
    %v114 = vlog2.pop %v92
    %v115 = vmul.f32 %v114, 0.6931472
    %v116 = vlog2.pop %v93
    %v117 = vmul.f32 %v116, 0.6931472
    %v118 = vmul.f32 %v70, 2.0
    %v119 = vmul.f32 %v71, 2.0
    %v120 = vmul.f32 %v72, 2.0
    %v121 = vmul.f32 %v73, 2.0
    %v122 = vsub.f32 1.0, %v118
    %v123 = vsub.f32 1.0, %v119
    %v124 = vsub.f32 1.0, %v120
    %v125 = vsub.f32 1.0, %v121
    %v126 = vmul.f32 %v66, %v122
    %v127 = vmul.f32 %v67, %v123
    %v128 = vmul.f32 %v68, %v124
    %v129 = vmul.f32 %v69, %v125
    %v130 = vmax.f32 %v126, 0.0
    %v131 = vmax.f32 %v127, 0.0
    %v132 = vmax.f32 %v128, 0.0
    %v133 = vmax.f32 %v129, 0.0
    %v134 = vadd.f32 %v130, %v111
    %v135 = vadd.f32 %v131, %v113
    %v136 = vadd.f32 %v132, %v115
    %v137 = vadd.f32 %v133, %v117
    %vm138 = vcmp.ge.f32.partialorder %v126, 0.0
    %vm139 = vcmp.ge.f32.partialorder %v127, 0.0
    %vm140 = vcmp.ge.f32.partialorder %v128, 0.0
    %vm141 = vcmp.ge.f32.partialorder %v129, 0.0
    %v142 = vsel %vm138, 1.0, %v83
    %v143 = vsel %vm139, 1.0, %v85
    %v144 = vsel %vm140, 1.0, %v87
    %v145 = vsel %vm141, 1.0, %v89
    %v146 = vmul.f32 %v142, %v106
    %v147 = vmul.f32 %v143, %v107
    %v148 = vmul.f32 %v144, %v108
    %v149 = vmul.f32 %v145, %v109
    %v150 = vmul.f32 %v146, %v146
    %v151 = vmul.f32 %v147, %v147
    %v152 = vmul.f32 %v148, %v148
    %v153 = vmul.f32 %v149, %v149
    %v154 = vmul.f32 %v150, %v134
    %v155 = vmul.f32 %v151, %v135
    %v156 = vmul.f32 %v152, %v136
    %v157 = vmul.f32 %v153, %v137
    %s158 = sadd.s32 0, 0
    %s159 = smul.u32 %s158, 8
    %v160 = vlaneseq
    %v161 = vshrl.u32 %v160, 7
    %v162 = vstv %s159
    %v163 = vadd.s32 %v162, %v161
    %vm164 = vcmp.lt.s32.totalorder %v163, 8
    %v165 = vsel %vm164, %v154, 0.0
    %v166 = vsel %vm164, %v155, 0.0
    %v167 = vsel %vm164, %v156, 0.0
    %v168 = vsel %vm164, %v157, 0.0
    %v169 = vld [vmem:[#allocation7] sm:$0xff]
    %v170 = vld [vmem:[#allocation7 + $0x8] sm:$0xff]
    %v171 = vld [vmem:[#allocation7 + $0x10] sm:$0xff]
    %v172 = vld [vmem:[#allocation7 + $0x18] sm:$0xff]
    %v173 = vadd.f32 %v165, 0.0
    %v174 = vadd.f32 %v166, 0.0
    %v175 = vadd.f32 %v167, 0.0
    %v176 = vadd.f32 %v168, 0.0
    %v177 = vadd.f32 %v169, %v173
    %v178 = vadd.f32 %v170, %v174
    %v179 = vadd.f32 %v171, %v175
    %v180 = vadd.f32 %v172, %v176
    %181 = vst [vmem:[#allocation7] sm:$0xff] %v177
    %182 = vst [vmem:[#allocation7 + $0x8] sm:$0xff] %v178
    %183 = vst [vmem:[#allocation7 + $0x10] sm:$0xff] %v179
    %184 = vst [vmem:[#allocation7 + $0x18] sm:$0xff] %v180
    // Predicated region
    $region22: #{tpu_custom_call.1} parent=1 // pred_check
      _
    $region23: #{tpu_custom_call.1} parent=1 // pred_check_branch
      %186 = sbr.rel (0) target = $region25
    $region24: #{tpu_custom_call.1} parent=1 // pred_region
      %188 = vsyncadd [#allocation4], 0
      %s190 = sshll.u32 [#allocation7], 4
      %s191 = int_to_ptr.vmem [resolvable:$true] %s190
      %s192 = sshll.u32 %s2, 4
      %s193 = int_to_ptr.hbm [resolvable:$true] %s192
      %195 = dma.vmem_to_hbm [thread:$0]  %s191, 512, %s193, [#allocation4]
    $region25: #{tpu_custom_call.1} parent=1 // pred_fallthru
      _
    // Predicated region
    $region26: #{tpu_custom_call.1} parent=1 // pred_check
      _
    $region27: #{tpu_custom_call.1} parent=1 // pred_check_branch
      %197 = sbr.rel (0) target = $region29
    $region28: #{tpu_custom_call.1} parent=1 // pred_region
      %199 = dma.done [#allocation4], 512
    $region29: #{tpu_custom_call.1} parent=1 // pred_fallthru
      _
    %200 = vsyncpa [#allocation3], 1
    %201 = vsyncpa [#allocation6], 1
    %202 = vsyncpa [#allocation4], 1

</llo_original>
